<compile_context>
chip_gen: v5e
topology: v5e:2x2
jax: 0.10.0
libtpu: 0.0.40
codegen_flags: <defaults>
</compile_context>

<pallas_src>
import math
import functools

import jax
import jax.numpy as jnp
from jax.experimental import pallas as pl
from jax.experimental.pallas import tpu as pltpu


def _round_up(x, m):
    return ((x + m - 1) // m) * m


def _vmem_capacity_bytes():
    """Physical VMEM per TensorCore (v5e/v6e: 128 MiB, v7x: 64 MiB)."""
    try:
        cap = getattr(pltpu.get_tpu_info(), "vmem_capacity_bytes", None)
        if cap:
            return int(cap)
    except Exception:
        pass
    return 64 * 1024 * 1024          # v7x-safe default if the query is unavailable


# ---------------------------------------------------------------------------
# Fast path: whole table resident in VMEM, gather with per-row VMEM loads.
# ---------------------------------------------------------------------------
def _embed_resident_kernel(ids_ref, lut_ref, out_ref, *, tokens_per_block, pack, scale):
    """
    ids_ref : SMEM (n_pad,) int32                      token ids (scalar prefetch)
    lut_ref : VMEM (vocab, d_model)                    full table (constant index map)
    out_ref : VMEM (tokens_per_block//pack, pack*d_model) lane-dense output block
    """
    base = pl.program_id(0) * tokens_per_block
    scale_f = jnp.float32(scale)                       # hoisted once
    n_groups = tokens_per_block // pack

    for g in range(n_groups):                          # static unroll: pure vld/vst, no DMA
        rows = [lut_ref[pl.ds(ids_ref[base + g * pack + p], 1), :]
                for p in range(pack)]
        row = rows[0] if pack == 1 else jnp.concatenate(rows, axis=-1)
        out_ref[pl.ds(g, 1), :] = (row.astype(jnp.float32) * scale_f).astype(out_ref.dtype)


# ---------------------------------------------------------------------------
# Fallback: table stays in HBM, manual multi-buffered row-gather DMAs.
# ---------------------------------------------------------------------------
def _embed_hbm_kernel(ids_ref, lut_hbm, out_ref, buf, sem, *,
                      tokens_per_block, chunk, n_slots, pack, n_valid, scale):
    """
    ids_ref : SMEM (n_pad,) int32
    lut_hbm : HBM  (vocab, d_model)   (memory_space=pl.ANY)
    out_ref : VMEM (tokens_per_block//pack, pack*d_model)
    buf     : VMEM (n_slots, chunk, d_model) gather scratch
    sem     : DMA semaphores (n_slots,)
    """
    base = pl.program_id(0) * tokens_per_block
    n_chunks = tokens_per_block // chunk
    d_model = buf.shape[2]
    rows_out = chunk // pack
    scale_f = jnp.float32(scale)

    def copy(tok, slot, t):
        return pltpu.make_async_copy(
            lut_hbm.at[pl.ds(tok, 1), :],
            buf.at[slot, pl.ds(t, 1), :],
            sem.at[slot])

    def fetch_chunk(c):
        # TODO(synk): coalesce duplicate/pad token ids within a chunk to drop
        # redundant row DMAs (descriptor latency dominates this path).
        @pl.when(base + c * chunk < n_valid)           # skip fully-padded tail chunks
        def _():
            slot = c % n_slots
            off = base + c * chunk
            for t in range(chunk):
                copy(ids_ref[off + t], slot, t).start()

    def wait_and_store(c):
        @pl.when(base + c * chunk < n_valid)
        def _():
            slot = c % n_slots
            for t in range(chunk):                     # all copies of a slot share one sem
                copy(0, slot, t).wait()
            vals = buf[slot].astype(jnp.float32) * scale_f
            vals = vals.reshape(rows_out, pack * d_model)   # lane-dense store layout
            out_ref[pl.ds(c * rows_out, rows_out), :] = vals.astype(out_ref.dtype)

    # Deep pipeline: keep up to n_slots chunks (n_slots * chunk row DMAs) in flight.
    for c in range(min(n_slots - 1, n_chunks)):
        fetch_chunk(c)
    for c in range(n_chunks):
        nxt = c + n_slots - 1
        if nxt < n_chunks:
            fetch_chunk(nxt)
        wait_and_store(c)


# ---------------------------------------------------------------------------
# Wrapper / dispatcher
# ---------------------------------------------------------------------------
def embeddings_forward(x, lut, *, block_tokens=128, chunk_tokens=64, n_slots=4):
    """Pallas equivalent of `Embeddings.forward`: lut[x] * sqrt(d_model)."""
    batch, seq = x.shape
    vocab, d_model = lut.shape
    n_tok = batch * seq
    scale = math.sqrt(d_model)
    itemsize = jnp.dtype(lut.dtype).itemsize
    n_slots = max(2, int(n_slots))

    # Lane-dense output: pack `pack` consecutive tokens along the lane axis when
    # d_model is narrower than a 128-lane vreg and divides 128.
    pack = 128 // d_model if (d_model < 128 and 128 % d_model == 0) else 1
    tile = 8 * pack                                    # tpb granularity (sublanes x pack)

    vmem_cap = _vmem_capacity_bytes()

    # ---- token block / chunk sizing -----------------------------------------
    tpb = min(_round_up(block_tokens, tile), _round_up(n_tok, tile))
    if n_tok >= 2 * tile:                              # v7x: keep >=2 blocks for 2 TCs
        tpb = min(tpb, _round_up(pl.cdiv(n_tok, 2), tile))
    chunk = tile * max(1, min(chunk_tokens, tpb) // tile)
    tpb = _round_up(tpb, chunk)                        # tpb multiple of chunk (and tile)
    n_pad = _round_up(n_tok, tpb)
    grid = n_pad // tpb

    ids = jnp.pad(x.reshape(n_tok).astype(jnp.int32), (0, n_pad - n_tok))

    out_rows, out_cols = tpb // pack, pack * d_model
    out_shape = jax.ShapeDtypeStruct((n_pad // pack, out_cols), lut.dtype)
    out_spec = pl.BlockSpec((out_rows, out_cols), lambda i, ids_ref: (i, 0))
    out_block_bytes = out_rows * out_cols * itemsize
    table_bytes = vocab * d_model * itemsize

    # Resident-LUT threshold: conservative (assume constant-index block may still
    # be double-buffered) and generation-aware via vmem_cap.
    resident_ok = (2 * table_bytes + 2 * out_block_bytes + (2 << 20)
                   <= int(0.75 * vmem_cap))

    if resident_ok:
        kernel = functools.partial(_embed_resident_kernel,
                                   tokens_per_block=tpb, pack=pack, scale=scale)
        in_specs = [pl.BlockSpec((vocab, d_model), lambda i, ids_ref: (0, 0))]
        scratch = []
        vmem_need = 2 * table_bytes + 4 * out_block_bytes + (4 << 20)
    else:
        kernel = functools.partial(_embed_hbm_kernel,
                                   tokens_per_block=tpb, chunk=chunk,
                                   n_slots=n_slots, pack=pack,
                                   n_valid=n_tok, scale=scale)
        in_specs = [pl.BlockSpec(memory_space=pl.ANY)]     # lut stays in HBM
        scratch = [pltpu.VMEM((n_slots, chunk, d_model), lut.dtype),
                   pltpu.SemaphoreType.DMA((n_slots,))]
        vmem_need = (2 * out_block_bytes
                     + n_slots * chunk * d_model * itemsize + (8 << 20))

    vmem_limit = int(min(max(vmem_need, 16 << 20), 0.9 * vmem_cap))

    out_flat = pl.pallas_call(
        kernel,
        out_shape=out_shape,
        grid_spec=pltpu.PrefetchScalarGridSpec(
            num_scalar_prefetch=1,                      # ids -> SMEM
            grid=(grid,),
            in_specs=in_specs,
            out_specs=out_spec,
            scratch_shapes=scratch,
        ),
        compiler_params=pltpu.CompilerParams(
            dimension_semantics=("parallel",),          # blocks are independent
            vmem_limit_bytes=vmem_limit,
        ),
    )(ids, lut)

    return out_flat.reshape(n_pad, d_model)[:n_tok].reshape(batch, seq, d_model)


def reference_forward(x, lut):
    d_model = lut.shape[1]
    return jnp.take(lut, x, axis=0) * math.sqrt(d_model)


if __name__ == "__main__":
    key = jax.random.PRNGKey(0)
    k_ids, k_lut = jax.random.split(key)

    batch, seq = 2, 8
    vocab, d_model = 64, 32

    # Deterministic synthetic parameters (nn.Embedding(vocab, d_model).weight)
    lut = jax.random.normal(k_lut, (vocab, d_model), dtype=jnp.float32)
    x = jax.random.randint(k_ids, (batch, seq), 0, vocab, dtype=jnp.int32)

    out = embeddings_forward(x, lut)
    out = jax.block_until_ready(out)

    ref = reference_forward(x, lut)
    assert out.shape == (batch, seq, d_model)
    assert jnp.allclose(out, ref, atol=1e-5, rtol=1e-5)

    print("KERNEL_OK")
</pallas_src>

<mosaic_0001>
module attributes {stable_mosaic.version = 11 : i64} {
  func.func @_embed_resident_kernel(%arg0: i32, %arg1: memref<32xi32, #tpu.memory_space<smem>>, %arg2: memref<64x32xf32, #tpu.memory_space<vmem>>, %arg3: memref<8x128xf32, #tpu.memory_space<vmem>>) attributes {dimension_semantics = [#tpu.dimension_semantics<parallel>], iteration_bounds = array<i64: 1>, scalar_prefetch = 1 : i64, scratch_operands = 0 : i64, tpu.core_type = #tpu.core_type<tc>, window_params = [{pipeline_mode = #tpu.pipeline_mode<synchronous>, transform_indices = @transform_0, window_bounds = array<i64: 64, 32>}, {transform_indices = @transform_1, window_bounds = array<i64: 8, 128>}]} {
    %c32_i32 = arith.constant 32 : i32
    %0 = arith.muli %arg0, %c32_i32 : i32
    %c0_i32 = arith.constant 0 : i32
    %1 = arith.addi %0, %c0_i32 : i32
    %c0_i32_0 = arith.constant 0 : i32
    %2 = arith.addi %1, %c0_i32_0 : i32
    %3 = arith.index_cast %2 : i32 to index
    %4 = memref.load %arg1[%3] : memref<32xi32, #tpu.memory_space<smem>>
    %5 = arith.index_cast %4 : i32 to index
    %c0 = arith.constant 0 : index
    %6 = vector.load %arg2[%5, %c0] : memref<64x32xf32, #tpu.memory_space<vmem>>, vector<1x32xf32>
    %c0_i32_1 = arith.constant 0 : i32
    %7 = arith.addi %0, %c0_i32_1 : i32
    %c1_i32 = arith.constant 1 : i32
    %8 = arith.addi %7, %c1_i32 : i32
    %9 = arith.index_cast %8 : i32 to index
    %10 = memref.load %arg1[%9] : memref<32xi32, #tpu.memory_space<smem>>
    %11 = arith.index_cast %10 : i32 to index
    %c0_2 = arith.constant 0 : index
    %12 = vector.load %arg2[%11, %c0_2] : memref<64x32xf32, #tpu.memory_space<vmem>>, vector<1x32xf32>
    %c0_i32_3 = arith.constant 0 : i32
    %13 = arith.addi %0, %c0_i32_3 : i32
    %c2_i32 = arith.constant 2 : i32
    %14 = arith.addi %13, %c2_i32 : i32
    %15 = arith.index_cast %14 : i32 to index
    %16 = memref.load %arg1[%15] : memref<32xi32, #tpu.memory_space<smem>>
    %17 = arith.index_cast %16 : i32 to index
    %c0_4 = arith.constant 0 : index
    %18 = vector.load %arg2[%17, %c0_4] : memref<64x32xf32, #tpu.memory_space<vmem>>, vector<1x32xf32>
    %c0_i32_5 = arith.constant 0 : i32
    %19 = arith.addi %0, %c0_i32_5 : i32
    %c3_i32 = arith.constant 3 : i32
    %20 = arith.addi %19, %c3_i32 : i32
    %21 = arith.index_cast %20 : i32 to index
    %22 = memref.load %arg1[%21] : memref<32xi32, #tpu.memory_space<smem>>
    %23 = arith.index_cast %22 : i32 to index
    %c0_6 = arith.constant 0 : index
    %24 = vector.load %arg2[%23, %c0_6] : memref<64x32xf32, #tpu.memory_space<vmem>>, vector<1x32xf32>
    %25 = tpu.concatenate %6, %12, %18, %24 in 1 : vector<1x32xf32>, vector<1x32xf32>, vector<1x32xf32>, vector<1x32xf32> -> vector<1x128xf32>
    %cst = arith.constant 5.65685415 : f32
    %26 = vector.broadcast %cst : f32 to vector<1x128xf32>
    %27 = arith.mulf %25, %26 : vector<1x128xf32>
    %c0_7 = arith.constant 0 : index
    %c0_8 = arith.constant 0 : index
    %28 = vector.load %arg3[%c0_7, %c0_8] : memref<8x128xf32, #tpu.memory_space<vmem>>, vector<1x128xf32>
    tpu.vector_store %arg3[%c0_7, %c0_8], %27 {strides = array<i32>} : memref<8x128xf32, #tpu.memory_space<vmem>>, vector<1x128xf32>,
    %c4_i32 = arith.constant 4 : i32
    %29 = arith.addi %0, %c4_i32 : i32
    %c0_i32_9 = arith.constant 0 : i32
    %30 = arith.addi %29, %c0_i32_9 : i32
    %31 = arith.index_cast %30 : i32 to index
    %32 = memref.load %arg1[%31] : memref<32xi32, #tpu.memory_space<smem>>
    %33 = arith.index_cast %32 : i32 to index
    %c0_10 = arith.constant 0 : index
    %34 = vector.load %arg2[%33, %c0_10] : memref<64x32xf32, #tpu.memory_space<vmem>>, vector<1x32xf32>
    %c4_i32_11 = arith.constant 4 : i32
    %35 = arith.addi %0, %c4_i32_11 : i32
    %c1_i32_12 = arith.constant 1 : i32
    %36 = arith.addi %35, %c1_i32_12 : i32
    %37 = arith.index_cast %36 : i32 to index
    %38 = memref.load %arg1[%37] : memref<32xi32, #tpu.memory_space<smem>>
    %39 = arith.index_cast %38 : i32 to index
    %c0_13 = arith.constant 0 : index
    %40 = vector.load %arg2[%39, %c0_13] : memref<64x32xf32, #tpu.memory_space<vmem>>, vector<1x32xf32>
    %c4_i32_14 = arith.constant 4 : i32
    %41 = arith.addi %0, %c4_i32_14 : i32
    %c2_i32_15 = arith.constant 2 : i32
    %42 = arith.addi %41, %c2_i32_15 : i32
    %43 = arith.index_cast %42 : i32 to index
    %44 = memref.load %arg1[%43] : memref<32xi32, #tpu.memory_space<smem>>
    %45 = arith.index_cast %44 : i32 to index
    %c0_16 = arith.constant 0 : index
    %46 = vector.load %arg2[%45, %c0_16] : memref<64x32xf32, #tpu.memory_space<vmem>>, vector<1x32xf32>
    %c4_i32_17 = arith.constant 4 : i32
    %47 = arith.addi %0, %c4_i32_17 : i32
    %c3_i32_18 = arith.constant 3 : i32
    %48 = arith.addi %47, %c3_i32_18 : i32
    %49 = arith.index_cast %48 : i32 to index
    %50 = memref.load %arg1[%49] : memref<32xi32, #tpu.memory_space<smem>>
    %51 = arith.index_cast %50 : i32 to index
    %c0_19 = arith.constant 0 : index
    %52 = vector.load %arg2[%51, %c0_19] : memref<64x32xf32, #tpu.memory_space<vmem>>, vector<1x32xf32>
    %53 = tpu.concatenate %34, %40, %46, %52 in 1 : vector<1x32xf32>, vector<1x32xf32>, vector<1x32xf32>, vector<1x32xf32> -> vector<1x128xf32>
    %cst_20 = arith.constant 5.65685415 : f32
    %54 = vector.broadcast %cst_20 : f32 to vector<1x128xf32>
    %55 = arith.mulf %53, %54 : vector<1x128xf32>
    %c1 = arith.constant 1 : index
    %c0_21 = arith.constant 0 : index
    %56 = vector.load %arg3[%c1, %c0_21] : memref<8x128xf32, #tpu.memory_space<vmem>>, vector<1x128xf32>
    tpu.vector_store %arg3[%c1, %c0_21], %55 {strides = array<i32>} : memref<8x128xf32, #tpu.memory_space<vmem>>, vector<1x128xf32>,
    %c8_i32 = arith.constant 8 : i32
    %57 = arith.addi %0, %c8_i32 : i32
    %c0_i32_22 = arith.constant 0 : i32
    %58 = arith.addi %57, %c0_i32_22 : i32
    %59 = arith.index_cast %58 : i32 to index
    %60 = memref.load %arg1[%59] : memref<32xi32, #tpu.memory_space<smem>>
    %61 = arith.index_cast %60 : i32 to index
    %c0_23 = arith.constant 0 : index
    %62 = vector.load %arg2[%61, %c0_23] : memref<64x32xf32, #tpu.memory_space<vmem>>, vector<1x32xf32>
    %c8_i32_24 = arith.constant 8 : i32
    %63 = arith.addi %0, %c8_i32_24 : i32
    %c1_i32_25 = arith.constant 1 : i32
    %64 = arith.addi %63, %c1_i32_25 : i32
    %65 = arith.index_cast %64 : i32 to index
    %66 = memref.load %arg1[%65] : memref<32xi32, #tpu.memory_space<smem>>
    %67 = arith.index_cast %66 : i32 to index
    %c0_26 = arith.constant 0 : index
    %68 = vector.load %arg2[%67, %c0_26] : memref<64x32xf32, #tpu.memory_space<vmem>>, vector<1x32xf32>
    %c8_i32_27 = arith.constant 8 : i32
    %69 = arith.addi %0, %c8_i32_27 : i32
    %c2_i32_28 = arith.constant 2 : i32
    %70 = arith.addi %69, %c2_i32_28 : i32
    %71 = arith.index_cast %70 : i32 to index
    %72 = memref.load %arg1[%71] : memref<32xi32, #tpu.memory_space<smem>>
    %73 = arith.index_cast %72 : i32 to index
    %c0_29 = arith.constant 0 : index
    %74 = vector.load %arg2[%73, %c0_29] : memref<64x32xf32, #tpu.memory_space<vmem>>, vector<1x32xf32>
    %c8_i32_30 = arith.constant 8 : i32
    %75 = arith.addi %0, %c8_i32_30 : i32
    %c3_i32_31 = arith.constant 3 : i32
    %76 = arith.addi %75, %c3_i32_31 : i32
    %77 = arith.index_cast %76 : i32 to index
    %78 = memref.load %arg1[%77] : memref<32xi32, #tpu.memory_space<smem>>
    %79 = arith.index_cast %78 : i32 to index
    %c0_32 = arith.constant 0 : index
    %80 = vector.load %arg2[%79, %c0_32] : memref<64x32xf32, #tpu.memory_space<vmem>>, vector<1x32xf32>
    %81 = tpu.concatenate %62, %68, %74, %80 in 1 : vector<1x32xf32>, vector<1x32xf32>, vector<1x32xf32>, vector<1x32xf32> -> vector<1x128xf32>
    %cst_33 = arith.constant 5.65685415 : f32
    %82 = vector.broadcast %cst_33 : f32 to vector<1x128xf32>
    %83 = arith.mulf %81, %82 : vector<1x128xf32>
    %c2 = arith.constant 2 : index
    %c0_34 = arith.constant 0 : index
    %84 = vector.load %arg3[%c2, %c0_34] : memref<8x128xf32, #tpu.memory_space<vmem>>, vector<1x128xf32>
    tpu.vector_store %arg3[%c2, %c0_34], %83 {strides = array<i32>} : memref<8x128xf32, #tpu.memory_space<vmem>>, vector<1x128xf32>,
    %c12_i32 = arith.constant 12 : i32
    %85 = arith.addi %0, %c12_i32 : i32
    %c0_i32_35 = arith.constant 0 : i32
    %86 = arith.addi %85, %c0_i32_35 : i32
    %87 = arith.index_cast %86 : i32 to index
    %88 = memref.load %arg1[%87] : memref<32xi32, #tpu.memory_space<smem>>
    %89 = arith.index_cast %88 : i32 to index
    %c0_36 = arith.constant 0 : index
    %90 = vector.load %arg2[%89, %c0_36] : memref<64x32xf32, #tpu.memory_space<vmem>>, vector<1x32xf32>
    %c12_i32_37 = arith.constant 12 : i32
    %91 = arith.addi %0, %c12_i32_37 : i32
    %c1_i32_38 = arith.constant 1 : i32
    %92 = arith.addi %91, %c1_i32_38 : i32
    %93 = arith.index_cast %92 : i32 to index
    %94 = memref.load %arg1[%93] : memref<32xi32, #tpu.memory_space<smem>>
    %95 = arith.index_cast %94 : i32 to index
    %c0_39 = arith.constant 0 : index
    %96 = vector.load %arg2[%95, %c0_39] : memref<64x32xf32, #tpu.memory_space<vmem>>, vector<1x32xf32>
    %c12_i32_40 = arith.constant 12 : i32
    %97 = arith.addi %0, %c12_i32_40 : i32
    %c2_i32_41 = arith.constant 2 : i32
    %98 = arith.addi %97, %c2_i32_41 : i32
    %99 = arith.index_cast %98 : i32 to index
    %100 = memref.load %arg1[%99] : memref<32xi32, #tpu.memory_space<smem>>
    %101 = arith.index_cast %100 : i32 to index
    %c0_42 = arith.constant 0 : index
    %102 = vector.load %arg2[%101, %c0_42] : memref<64x32xf32, #tpu.memory_space<vmem>>, vector<1x32xf32>
    %c12_i32_43 = arith.constant 12 : i32
    %103 = arith.addi %0, %c12_i32_43 : i32
    %c3_i32_44 = arith.constant 3 : i32
    %104 = arith.addi %103, %c3_i32_44 : i32
    %105 = arith.index_cast %104 : i32 to index
    %106 = memref.load %arg1[%105] : memref<32xi32, #tpu.memory_space<smem>>
    %107 = arith.index_cast %106 : i32 to index
    %c0_45 = arith.constant 0 : index
    %108 = vector.load %arg2[%107, %c0_45] : memref<64x32xf32, #tpu.memory_space<vmem>>, vector<1x32xf32>
    %109 = tpu.concatenate %90, %96, %102, %108 in 1 : vector<1x32xf32>, vector<1x32xf32>, vector<1x32xf32>, vector<1x32xf32> -> vector<1x128xf32>
    %cst_46 = arith.constant 5.65685415 : f32
    %110 = vector.broadcast %cst_46 : f32 to vector<1x128xf32>
    %111 = arith.mulf %109, %110 : vector<1x128xf32>
    %c3 = arith.constant 3 : index
    %c0_47 = arith.constant 0 : index
    %112 = vector.load %arg3[%c3, %c0_47] : memref<8x128xf32, #tpu.memory_space<vmem>>, vector<1x128xf32>
    tpu.vector_store %arg3[%c3, %c0_47], %111 {strides = array<i32>} : memref<8x128xf32, #tpu.memory_space<vmem>>, vector<1x128xf32>,
    %c16_i32 = arith.constant 16 : i32
    %113 = arith.addi %0, %c16_i32 : i32
    %c0_i32_48 = arith.constant 0 : i32
    %114 = arith.addi %113, %c0_i32_48 : i32
    %115 = arith.index_cast %114 : i32 to index
    %116 = memref.load %arg1[%115] : memref<32xi32, #tpu.memory_space<smem>>
    %117 = arith.index_cast %116 : i32 to index
    %c0_49 = arith.constant 0 : index
    %118 = vector.load %arg2[%117, %c0_49] : memref<64x32xf32, #tpu.memory_space<vmem>>, vector<1x32xf32>
    %c16_i32_50 = arith.constant 16 : i32
    %119 = arith.addi %0, %c16_i32_50 : i32
    %c1_i32_51 = arith.constant 1 : i32
    %120 = arith.addi %119, %c1_i32_51 : i32
    %121 = arith.index_cast %120 : i32 to index
    %122 = memref.load %arg1[%121] : memref<32xi32, #tpu.memory_space<smem>>
    %123 = arith.index_cast %122 : i32 to index
    %c0_52 = arith.constant 0 : index
    %124 = vector.load %arg2[%123, %c0_52] : memref<64x32xf32, #tpu.memory_space<vmem>>, vector<1x32xf32>
    %c16_i32_53 = arith.constant 16 : i32
    %125 = arith.addi %0, %c16_i32_53 : i32
    %c2_i32_54 = arith.constant 2 : i32
    %126 = arith.addi %125, %c2_i32_54 : i32
    %127 = arith.index_cast %126 : i32 to index
    %128 = memref.load %arg1[%127] : memref<32xi32, #tpu.memory_space<smem>>
    %129 = arith.index_cast %128 : i32 to index
    %c0_55 = arith.constant 0 : index
    %130 = vector.load %arg2[%129, %c0_55] : memref<64x32xf32, #tpu.memory_space<vmem>>, vector<1x32xf32>
    %c16_i32_56 = arith.constant 16 : i32
    %131 = arith.addi %0, %c16_i32_56 : i32
    %c3_i32_57 = arith.constant 3 : i32
    %132 = arith.addi %131, %c3_i32_57 : i32
    %133 = arith.index_cast %132 : i32 to index
    %134 = memref.load %arg1[%133] : memref<32xi32, #tpu.memory_space<smem>>
    %135 = arith.index_cast %134 : i32 to index
    %c0_58 = arith.constant 0 : index
    %136 = vector.load %arg2[%135, %c0_58] : memref<64x32xf32, #tpu.memory_space<vmem>>, vector<1x32xf32>
    %137 = tpu.concatenate %118, %124, %130, %136 in 1 : vector<1x32xf32>, vector<1x32xf32>, vector<1x32xf32>, vector<1x32xf32> -> vector<1x128xf32>
    %cst_59 = arith.constant 5.65685415 : f32
    %138 = vector.broadcast %cst_59 : f32 to vector<1x128xf32>
    %139 = arith.mulf %137, %138 : vector<1x128xf32>
    %c4 = arith.constant 4 : index
    %c0_60 = arith.constant 0 : index
    %140 = vector.load %arg3[%c4, %c0_60] : memref<8x128xf32, #tpu.memory_space<vmem>>, vector<1x128xf32>
    tpu.vector_store %arg3[%c4, %c0_60], %139 {strides = array<i32>} : memref<8x128xf32, #tpu.memory_space<vmem>>, vector<1x128xf32>,
    %c20_i32 = arith.constant 20 : i32
    %141 = arith.addi %0, %c20_i32 : i32
    %c0_i32_61 = arith.constant 0 : i32
    %142 = arith.addi %141, %c0_i32_61 : i32
    %143 = arith.index_cast %142 : i32 to index
    %144 = memref.load %arg1[%143] : memref<32xi32, #tpu.memory_space<smem>>
    %145 = arith.index_cast %144 : i32 to index
    %c0_62 = arith.constant 0 : index
    %146 = vector.load %arg2[%145, %c0_62] : memref<64x32xf32, #tpu.memory_space<vmem>>, vector<1x32xf32>
    %c20_i32_63 = arith.constant 20 : i32
    %147 = arith.addi %0, %c20_i32_63 : i32
    %c1_i32_64 = arith.constant 1 : i32
    %148 = arith.addi %147, %c1_i32_64 : i32
    %149 = arith.index_cast %148 : i32 to index
    %150 = memref.load %arg1[%149] : memref<32xi32, #tpu.memory_space<smem>>
    %151 = arith.index_cast %150 : i32 to index
    %c0_65 = arith.constant 0 : index
    %152 = vector.load %arg2[%151, %c0_65] : memref<64x32xf32, #tpu.memory_space<vmem>>, vector<1x32xf32>
    %c20_i32_66 = arith.constant 20 : i32
    %153 = arith.addi %0, %c20_i32_66 : i32
    %c2_i32_67 = arith.constant 2 : i32
    %154 = arith.addi %153, %c2_i32_67 : i32
    %155 = arith.index_cast %154 : i32 to index
    %156 = memref.load %arg1[%155] : memref<32xi32, #tpu.memory_space<smem>>
    %157 = arith.index_cast %156 : i32 to index
    %c0_68 = arith.constant 0 : index
    %158 = vector.load %arg2[%157, %c0_68] : memref<64x32xf32, #tpu.memory_space<vmem>>, vector<1x32xf32>
    %c20_i32_69 = arith.constant 20 : i32
    %159 = arith.addi %0, %c20_i32_69 : i32
    %c3_i32_70 = arith.constant 3 : i32
    %160 = arith.addi %159, %c3_i32_70 : i32
    %161 = arith.index_cast %160 : i32 to index
    %162 = memref.load %arg1[%161] : memref<32xi32, #tpu.memory_space<smem>>
    %163 = arith.index_cast %162 : i32 to index
    %c0_71 = arith.constant 0 : index
    %164 = vector.load %arg2[%163, %c0_71] : memref<64x32xf32, #tpu.memory_space<vmem>>, vector<1x32xf32>
    %165 = tpu.concatenate %146, %152, %158, %164 in 1 : vector<1x32xf32>, vector<1x32xf32>, vector<1x32xf32>, vector<1x32xf32> -> vector<1x128xf32>
    %cst_72 = arith.constant 5.65685415 : f32
    %166 = vector.broadcast %cst_72 : f32 to vector<1x128xf32>
    %167 = arith.mulf %165, %166 : vector<1x128xf32>
    %c5 = arith.constant 5 : index
    %c0_73 = arith.constant 0 : index
    %168 = vector.load %arg3[%c5, %c0_73] : memref<8x128xf32, #tpu.memory_space<vmem>>, vector<1x128xf32>
    tpu.vector_store %arg3[%c5, %c0_73], %167 {strides = array<i32>} : memref<8x128xf32, #tpu.memory_space<vmem>>, vector<1x128xf32>,
    %c24_i32 = arith.constant 24 : i32
    %169 = arith.addi %0, %c24_i32 : i32
    %c0_i32_74 = arith.constant 0 : i32
    %170 = arith.addi %169, %c0_i32_74 : i32
    %171 = arith.index_cast %170 : i32 to index
    %172 = memref.load %arg1[%171] : memref<32xi32, #tpu.memory_space<smem>>
    %173 = arith.index_cast %172 : i32 to index
    %c0_75 = arith.constant 0 : index
    %174 = vector.load %arg2[%173, %c0_75] : memref<64x32xf32, #tpu.memory_space<vmem>>, vector<1x32xf32>
    %c24_i32_76 = arith.constant 24 : i32
    %175 = arith.addi %0, %c24_i32_76 : i32
    %c1_i32_77 = arith.constant 1 : i32
    %176 = arith.addi %175, %c1_i32_77 : i32
    %177 = arith.index_cast %176 : i32 to index
    %178 = memref.load %arg1[%177] : memref<32xi32, #tpu.memory_space<smem>>
    %179 = arith.index_cast %178 : i32 to index
    %c0_78 = arith.constant 0 : index
    %180 = vector.load %arg2[%179, %c0_78] : memref<64x32xf32, #tpu.memory_space<vmem>>, vector<1x32xf32>
    %c24_i32_79 = arith.constant 24 : i32
    %181 = arith.addi %0, %c24_i32_79 : i32
    %c2_i32_80 = arith.constant 2 : i32
    %182 = arith.addi %181, %c2_i32_80 : i32
    %183 = arith.index_cast %182 : i32 to index
    %184 = memref.load %arg1[%183] : memref<32xi32, #tpu.memory_space<smem>>
    %185 = arith.index_cast %184 : i32 to index
    %c0_81 = arith.constant 0 : index
    %186 = vector.load %arg2[%185, %c0_81] : memref<64x32xf32, #tpu.memory_space<vmem>>, vector<1x32xf32>
    %c24_i32_82 = arith.constant 24 : i32
    %187 = arith.addi %0, %c24_i32_82 : i32
    %c3_i32_83 = arith.constant 3 : i32
    %188 = arith.addi %187, %c3_i32_83 : i32
    %189 = arith.index_cast %188 : i32 to index
    %190 = memref.load %arg1[%189] : memref<32xi32, #tpu.memory_space<smem>>
    %191 = arith.index_cast %190 : i32 to index
    %c0_84 = arith.constant 0 : index
    %192 = vector.load %arg2[%191, %c0_84] : memref<64x32xf32, #tpu.memory_space<vmem>>, vector<1x32xf32>
    %193 = tpu.concatenate %174, %180, %186, %192 in 1 : vector<1x32xf32>, vector<1x32xf32>, vector<1x32xf32>, vector<1x32xf32> -> vector<1x128xf32>
    %cst_85 = arith.constant 5.65685415 : f32
    %194 = vector.broadcast %cst_85 : f32 to vector<1x128xf32>
    %195 = arith.mulf %193, %194 : vector<1x128xf32>
    %c6 = arith.constant 6 : index
    %c0_86 = arith.constant 0 : index
    %196 = vector.load %arg3[%c6, %c0_86] : memref<8x128xf32, #tpu.memory_space<vmem>>, vector<1x128xf32>
    tpu.vector_store %arg3[%c6, %c0_86], %195 {strides = array<i32>} : memref<8x128xf32, #tpu.memory_space<vmem>>, vector<1x128xf32>,
    %c28_i32 = arith.constant 28 : i32
    %197 = arith.addi %0, %c28_i32 : i32
    %c0_i32_87 = arith.constant 0 : i32
    %198 = arith.addi %197, %c0_i32_87 : i32
    %199 = arith.index_cast %198 : i32 to index
    %200 = memref.load %arg1[%199] : memref<32xi32, #tpu.memory_space<smem>>
    %201 = arith.index_cast %200 : i32 to index
    %c0_88 = arith.constant 0 : index
    %202 = vector.load %arg2[%201, %c0_88] : memref<64x32xf32, #tpu.memory_space<vmem>>, vector<1x32xf32>
    %c28_i32_89 = arith.constant 28 : i32
    %203 = arith.addi %0, %c28_i32_89 : i32
    %c1_i32_90 = arith.constant 1 : i32
    %204 = arith.addi %203, %c1_i32_90 : i32
    %205 = arith.index_cast %204 : i32 to index
    %206 = memref.load %arg1[%205] : memref<32xi32, #tpu.memory_space<smem>>
    %207 = arith.index_cast %206 : i32 to index
    %c0_91 = arith.constant 0 : index
    %208 = vector.load %arg2[%207, %c0_91] : memref<64x32xf32, #tpu.memory_space<vmem>>, vector<1x32xf32>
    %c28_i32_92 = arith.constant 28 : i32
    %209 = arith.addi %0, %c28_i32_92 : i32
    %c2_i32_93 = arith.constant 2 : i32
    %210 = arith.addi %209, %c2_i32_93 : i32
    %211 = arith.index_cast %210 : i32 to index
    %212 = memref.load %arg1[%211] : memref<32xi32, #tpu.memory_space<smem>>
    %213 = arith.index_cast %212 : i32 to index
    %c0_94 = arith.constant 0 : index
    %214 = vector.load %arg2[%213, %c0_94] : memref<64x32xf32, #tpu.memory_space<vmem>>, vector<1x32xf32>
    %c28_i32_95 = arith.constant 28 : i32
    %215 = arith.addi %0, %c28_i32_95 : i32
    %c3_i32_96 = arith.constant 3 : i32
    %216 = arith.addi %215, %c3_i32_96 : i32
    %217 = arith.index_cast %216 : i32 to index
    %218 = memref.load %arg1[%217] : memref<32xi32, #tpu.memory_space<smem>>
    %219 = arith.index_cast %218 : i32 to index
    %c0_97 = arith.constant 0 : index
    %220 = vector.load %arg2[%219, %c0_97] : memref<64x32xf32, #tpu.memory_space<vmem>>, vector<1x32xf32>
    %221 = tpu.concatenate %202, %208, %214, %220 in 1 : vector<1x32xf32>, vector<1x32xf32>, vector<1x32xf32>, vector<1x32xf32> -> vector<1x128xf32>
    %cst_98 = arith.constant 5.65685415 : f32
    %222 = vector.broadcast %cst_98 : f32 to vector<1x128xf32>
    %223 = arith.mulf %221, %222 : vector<1x128xf32>
    %c7 = arith.constant 7 : index
    %c0_99 = arith.constant 0 : index
    %224 = vector.load %arg3[%c7, %c0_99] : memref<8x128xf32, #tpu.memory_space<vmem>>, vector<1x128xf32>
    tpu.vector_store %arg3[%c7, %c0_99], %223 {strides = array<i32>} : memref<8x128xf32, #tpu.memory_space<vmem>>, vector<1x128xf32>,
    return
  }
  func.func @transform_0(%arg0: i32, %arg1: memref<32xi32, #tpu.memory_space<smem>>) -> (i32, i32) {
    %c0_i32 = arith.constant 0 : i32
    %c0_i32_0 = arith.constant 0 : i32
    %c0_i32_1 = arith.constant 0 : i32
    return %c0_i32, %c0_i32_0 : i32, i32
  }
  func.func @transform_1(%arg0: i32, %arg1: memref<32xi32, #tpu.memory_space<smem>>) -> (i32, i32) {
    %c0_i32 = arith.constant 0 : i32
    %c0_i32_0 = arith.constant 0 : i32
    return %arg0, %c0_i32 : i32, i32
  }
}

</mosaic_0001>

<llo_original>
// kernel: tpu_custom_call.1
$region0: #{tpu_custom_call.1}
  #allocation0 [shape = 'u32[]', space=smem, size = 0x4, offset = 0x4, fixed_abs, tag = 'smem constant byte address 0x4 - core index']
  #allocation1 [shape = 'u32[72,128]{1,0:T(1,128)}', space=vmem, size = 0x9000, scoped, tag = 'internal scratch']
  #allocation2 [shape = 's32[1]{0}', space=sflag, size = 0x4, scoped, tag = 'scoped memory for tpu_custom_call.1']
  #allocation3 [shape = 'u8[512]{0}', space=smem, size = 0x200, scoped, tag = 'prefetched SMEM operand 0']
  %s0 = inlined_call_operand.vmem [shape: s32[32], index: 0, kind: input, shape index: {}]
  %s1 = inlined_call_operand.vmem [shape: f32[64,32], index: 1, kind: input, shape index: {}]
  %s2 = inlined_call_operand.hbm [shape: f32[8,128], index: 2, kind: output, shape index: {}]
  %s3 = sld [smem:[#allocation0]]
  $region14: #{tpu_custom_call.1} parent=0
    _
  %s5 = ssub.s32 1, %s3
  %s6 = scalar_select 0, %s5, %s3
  %s8 = sshll.u32 %s0, 4
  %s9 = int_to_ptr.vmem [resolvable:$true] %s8
  %11 = dma.vmem_to_smem %s9, 16, [#allocation3], [#allocation2]
  %13 = dma.done [#allocation2], 16
  %14 = sfence
  $region1: #{tpu_custom_call.1} parent=0
    #allocation4 [shape = 'u8[4096]{0}', space=vmem, size = 0x1000, scoped, tag = 'output window, operand 0, single buffered']
    #allocation5 [shape = 's32[1]{0}', space=sflag, size = 0x4, scoped, tag = 'scoped memory for tpu_custom_call.1']
    %15 = vsyncpa [#allocation5], 0
    // Predicated region
    $region2: #{tpu_custom_call.1} parent=1 // pred_check
      _
    $region3: #{tpu_custom_call.1} parent=1 // pred_check_branch
      %17 = sbr.rel (0) target = $region5
    $region4: #{tpu_custom_call.1} parent=1 // pred_region
      _
    $region5: #{tpu_custom_call.1} parent=1 // pred_fallthru
      _
    %s18 = smul.u32 0, 32
    %s19 = sld [smem:[#allocation3 + %s18]]
    %s20 = scalar_lea.vmem %s1, %s19
    %v21 = vld [vmem:[%s20] sm:$0x1]
    %s22 = sadd.s32 %s18, 1
    %s23 = sld [smem:[#allocation3 + %s22]]
    %s24 = scalar_lea.vmem %s1, %s23
    %v25 = vld [vmem:[%s24] sm:$0x1]
    %s26 = sadd.s32 %s18, 2
    %s27 = sld [smem:[#allocation3 + %s26]]
    %s28 = scalar_lea.vmem %s1, %s27
    %v29 = vld [vmem:[%s28] sm:$0x1]
    %s30 = sadd.s32 %s18, 3
    %s31 = sld [smem:[#allocation3 + %s30]]
    %s32 = scalar_lea.vmem %s1, %s31
    %v33 = vld [vmem:[%s32] sm:$0x1]
    %35 = vrot.lane.b32.xlu0 %v25, 32
    %v36 = vpop.permute.xlu0 %35
    %39 = vrot.lane.b32.xlu0 %v29, 64
    %v40 = vpop.permute.xlu0 %39
    %43 = vrot.lane.b32.xlu0 %v33, 96
    %v44 = vpop.permute.xlu0 %43
    %vm46 = vcmask 261120
    %v47 = vsel %vm46, %v21, %v36
    %vm48 = vcmask 523264
    %v49 = vsel %vm48, %v47, %v40
    %vm50 = vcmask 785408
    %v51 = vsel %vm50, %v49, %v44
    %v52 = vmul.f32 %v51, 5.656854
    %53 = vst [vmem:[#allocation4] sm:$0x1] %v52
    %s54 = sadd.s32 %s18, 4
    %s55 = sld [smem:[#allocation3 + %s54]]
    %s56 = scalar_lea.vmem %s1, %s55
    %v57 = vld [vmem:[%s56] sm:$0x1]
    %s58 = sadd.s32 %s18, 5
    %s59 = sld [smem:[#allocation3 + %s58]]
    %s60 = scalar_lea.vmem %s1, %s59
    %v61 = vld [vmem:[%s60] sm:$0x1]
    %s62 = sadd.s32 %s18, 6
    %s63 = sld [smem:[#allocation3 + %s62]]
    %s64 = scalar_lea.vmem %s1, %s63
    %v65 = vld [vmem:[%s64] sm:$0x1]
    %s66 = sadd.s32 %s18, 7
    %s67 = sld [smem:[#allocation3 + %s66]]
    %s68 = scalar_lea.vmem %s1, %s67
    %v69 = vld [vmem:[%s68] sm:$0x1]
    %71 = vrot.lane.b32.xlu0 %v61, 32
    %v72 = vpop.permute.xlu0 %71
    %75 = vrot.lane.b32.xlu0 %v65, 64
    %v76 = vpop.permute.xlu0 %75
    %79 = vrot.lane.b32.xlu0 %v69, 96
    %v80 = vpop.permute.xlu0 %79
    %v82 = vsel %vm46, %v57, %v72
    %v83 = vsel %vm48, %v82, %v76
    %v84 = vsel %vm50, %v83, %v80
    %v85 = vmul.f32 %v84, 5.656854
    %86 = vst [vmem:[#allocation4 + $0x1] sm:$0x1] %v85
    %s87 = sadd.s32 %s18, 8
    %s88 = sld [smem:[#allocation3 + %s87]]
    %s89 = scalar_lea.vmem %s1, %s88
    %v90 = vld [vmem:[%s89] sm:$0x1]
    %s91 = sadd.s32 %s18, 9
    %s92 = sld [smem:[#allocation3 + %s91]]
    %s93 = scalar_lea.vmem %s1, %s92
    %v94 = vld [vmem:[%s93] sm:$0x1]
    %s95 = sadd.s32 %s18, 10
    %s96 = sld [smem:[#allocation3 + %s95]]
    %s97 = scalar_lea.vmem %s1, %s96
    %v98 = vld [vmem:[%s97] sm:$0x1]
    %s99 = sadd.s32 %s18, 11
    %s100 = sld [smem:[#allocation3 + %s99]]
    %s101 = scalar_lea.vmem %s1, %s100
    %v102 = vld [vmem:[%s101] sm:$0x1]
    %104 = vrot.lane.b32.xlu0 %v94, 32
    %v105 = vpop.permute.xlu0 %104
    %108 = vrot.lane.b32.xlu0 %v98, 64
    %v109 = vpop.permute.xlu0 %108
    %112 = vrot.lane.b32.xlu0 %v102, 96
    %v113 = vpop.permute.xlu0 %112
    %v115 = vsel %vm46, %v90, %v105
    %v116 = vsel %vm48, %v115, %v109
    %v117 = vsel %vm50, %v116, %v113
    %v118 = vmul.f32 %v117, 5.656854
    %119 = vst [vmem:[#allocation4 + $0x2] sm:$0x1] %v118
    %s120 = sadd.s32 %s18, 12
    %s121 = sld [smem:[#allocation3 + %s120]]
    %s122 = scalar_lea.vmem %s1, %s121
    %v123 = vld [vmem:[%s122] sm:$0x1]
    %s124 = sadd.s32 %s18, 13
    %s125 = sld [smem:[#allocation3 + %s124]]
    %s126 = scalar_lea.vmem %s1, %s125
    %v127 = vld [vmem:[%s126] sm:$0x1]
    %s128 = sadd.s32 %s18, 14
    %s129 = sld [smem:[#allocation3 + %s128]]
    %s130 = scalar_lea.vmem %s1, %s129
    %v131 = vld [vmem:[%s130] sm:$0x1]
    %s132 = sadd.s32 %s18, 15
    %s133 = sld [smem:[#allocation3 + %s132]]
    %s134 = scalar_lea.vmem %s1, %s133
    %v135 = vld [vmem:[%s134] sm:$0x1]
    %137 = vrot.lane.b32.xlu0 %v127, 32
    %v138 = vpop.permute.xlu0 %137
    %141 = vrot.lane.b32.xlu0 %v131, 64
    %v142 = vpop.permute.xlu0 %141
    %145 = vrot.lane.b32.xlu0 %v135, 96
    %v146 = vpop.permute.xlu0 %145
    %v148 = vsel %vm46, %v123, %v138
    %v149 = vsel %vm48, %v148, %v142
    %v150 = vsel %vm50, %v149, %v146
    %v151 = vmul.f32 %v150, 5.656854
    %152 = vst [vmem:[#allocation4 + $0x3] sm:$0x1] %v151
    %s153 = sadd.s32 %s18, 16
    %s154 = sld [smem:[#allocation3 + %s153]]
    %s155 = scalar_lea.vmem %s1, %s154
    %v156 = vld [vmem:[%s155] sm:$0x1]
    %s157 = sadd.s32 %s18, 17
    %s158 = sld [smem:[#allocation3 + %s157]]
    %s159 = scalar_lea.vmem %s1, %s158
    %v160 = vld [vmem:[%s159] sm:$0x1]
    %s161 = sadd.s32 %s18, 18
    %s162 = sld [smem:[#allocation3 + %s161]]
    %s163 = scalar_lea.vmem %s1, %s162
    %v164 = vld [vmem:[%s163] sm:$0x1]
    %s165 = sadd.s32 %s18, 19
    %s166 = sld [smem:[#allocation3 + %s165]]
    %s167 = scalar_lea.vmem %s1, %s166
    %v168 = vld [vmem:[%s167] sm:$0x1]
    %170 = vrot.lane.b32.xlu0 %v160, 32
    %v171 = vpop.permute.xlu0 %170
    %174 = vrot.lane.b32.xlu0 %v164, 64
    %v175 = vpop.permute.xlu0 %174
    %178 = vrot.lane.b32.xlu0 %v168, 96
    %v179 = vpop.permute.xlu0 %178
    %v181 = vsel %vm46, %v156, %v171
    %v182 = vsel %vm48, %v181, %v175
    %v183 = vsel %vm50, %v182, %v179
    %v184 = vmul.f32 %v183, 5.656854
    %185 = vst [vmem:[#allocation4 + $0x4] sm:$0x1] %v184
    %s186 = sadd.s32 %s18, 20
    %s187 = sld [smem:[#allocation3 + %s186]]
    %s188 = scalar_lea.vmem %s1, %s187
    %v189 = vld [vmem:[%s188] sm:$0x1]
    %s190 = sadd.s32 %s18, 21
    %s191 = sld [smem:[#allocation3 + %s190]]
    %s192 = scalar_lea.vmem %s1, %s191
    %v193 = vld [vmem:[%s192] sm:$0x1]
    %s194 = sadd.s32 %s18, 22
    %s195 = sld [smem:[#allocation3 + %s194]]
    %s196 = scalar_lea.vmem %s1, %s195
    %v197 = vld [vmem:[%s196] sm:$0x1]
    %s198 = sadd.s32 %s18, 23
    %s199 = sld [smem:[#allocation3 + %s198]]
    %s200 = scalar_lea.vmem %s1, %s199
    %v201 = vld [vmem:[%s200] sm:$0x1]
    %203 = vrot.lane.b32.xlu0 %v193, 32
    %v204 = vpop.permute.xlu0 %203
    %207 = vrot.lane.b32.xlu0 %v197, 64
    %v208 = vpop.permute.xlu0 %207
    %211 = vrot.lane.b32.xlu0 %v201, 96
    %v212 = vpop.permute.xlu0 %211
    %v214 = vsel %vm46, %v189, %v204
    %v215 = vsel %vm48, %v214, %v208
    %v216 = vsel %vm50, %v215, %v212
    %v217 = vmul.f32 %v216, 5.656854
    %218 = vst [vmem:[#allocation4 + $0x5] sm:$0x1] %v217
    %s219 = sadd.s32 %s18, 24
    %s220 = sld [smem:[#allocation3 + %s219]]
    %s221 = scalar_lea.vmem %s1, %s220
    %v222 = vld [vmem:[%s221] sm:$0x1]
    %s223 = sadd.s32 %s18, 25
    %s224 = sld [smem:[#allocation3 + %s223]]
    %s225 = scalar_lea.vmem %s1, %s224
    %v226 = vld [vmem:[%s225] sm:$0x1]
    %s227 = sadd.s32 %s18, 26
    %s228 = sld [smem:[#allocation3 + %s227]]
    %s229 = scalar_lea.vmem %s1, %s228
    %v230 = vld [vmem:[%s229] sm:$0x1]
    %s231 = sadd.s32 %s18, 27
    %s232 = sld [smem:[#allocation3 + %s231]]
    %s233 = scalar_lea.vmem %s1, %s232
    %v234 = vld [vmem:[%s233] sm:$0x1]
    %236 = vrot.lane.b32.xlu0 %v226, 32
    %v237 = vpop.permute.xlu0 %236
    %240 = vrot.lane.b32.xlu0 %v230, 64
    %v241 = vpop.permute.xlu0 %240
    %244 = vrot.lane.b32.xlu0 %v234, 96
    %v245 = vpop.permute.xlu0 %244
    %v247 = vsel %vm46, %v222, %v237
    %v248 = vsel %vm48, %v247, %v241
    %v249 = vsel %vm50, %v248, %v245
    %v250 = vmul.f32 %v249, 5.656854
    %251 = vst [vmem:[#allocation4 + $0x6] sm:$0x1] %v250
    %s252 = sadd.s32 %s18, 28
    %s253 = sld [smem:[#allocation3 + %s252]]
    %s254 = scalar_lea.vmem %s1, %s253
    %v255 = vld [vmem:[%s254] sm:$0x1]
    %s256 = sadd.s32 %s18, 29
    %s257 = sld [smem:[#allocation3 + %s256]]
    %s258 = scalar_lea.vmem %s1, %s257
    %v259 = vld [vmem:[%s258] sm:$0x1]
    %s260 = sadd.s32 %s18, 30
    %s261 = sld [smem:[#allocation3 + %s260]]
    %s262 = scalar_lea.vmem %s1, %s261
    %v263 = vld [vmem:[%s262] sm:$0x1]
    %s264 = sadd.s32 %s18, 31
    %s265 = sld [smem:[#allocation3 + %s264]]
    %s266 = scalar_lea.vmem %s1, %s265
    %v267 = vld [vmem:[%s266] sm:$0x1]
    %269 = vrot.lane.b32.xlu0 %v259, 32
    %v270 = vpop.permute.xlu0 %269
    %273 = vrot.lane.b32.xlu0 %v263, 64
    %v274 = vpop.permute.xlu0 %273
    %277 = vrot.lane.b32.xlu0 %v267, 96
    %v278 = vpop.permute.xlu0 %277
    %v280 = vsel %vm46, %v255, %v270
    %v281 = vsel %vm48, %v280, %v274
    %v282 = vsel %vm50, %v281, %v278
    %v283 = vmul.f32 %v282, 5.656854
    %284 = vst [vmem:[#allocation4 + $0x7] sm:$0x1] %v283
    // Predicated region
    $region6: #{tpu_custom_call.1} parent=1 // pred_check
      _
    $region7: #{tpu_custom_call.1} parent=1 // pred_check_branch
      %286 = sbr.rel (0) target = $region9
    $region8: #{tpu_custom_call.1} parent=1 // pred_region
      %288 = vsyncadd [#allocation5], 0
      %s290 = sshll.u32 [#allocation4], 4
      %s291 = int_to_ptr.vmem [resolvable:$true] %s290
      %s292 = sshll.u32 %s2, 4
      %s293 = int_to_ptr.hbm [resolvable:$true] %s292
      %295 = dma.vmem_to_hbm [thread:$0]  %s291, 128, %s293, [#allocation5]
    $region9: #{tpu_custom_call.1} parent=1 // pred_fallthru
      _
    // Predicated region
    $region10: #{tpu_custom_call.1} parent=1 // pred_check
      _
    $region11: #{tpu_custom_call.1} parent=1 // pred_check_branch
      %297 = sbr.rel (0) target = $region13
    $region12: #{tpu_custom_call.1} parent=1 // pred_region
      %299 = dma.done [#allocation5], 128
    $region13: #{tpu_custom_call.1} parent=1 // pred_fallthru
      _
    %300 = vsyncpa [#allocation5], 1

</llo_original>
